<compile_context>
chip_gen: v7x
topology: tpu7x:2x2x1
jax: 0.10.0
libtpu: 0.0.40
codegen_flags: <defaults>
</compile_context>

<pallas_src>
import jax
import jax.numpy as jnp
from jax import lax
from jax.experimental import pallas as pl
from jax.experimental.pallas import tpu as pltpu


def _round_up(n, m):
    return ((n + m - 1) // m) * m


def _leaky_relu(x, negative_slope=0.01):
    # max(x, a*x) == leaky_relu(x) for 0 < a < 1 (torch default a = 0.01).
    return jnp.maximum(x, negative_slope * x)


def qnetwork_kernel(x_ref, w1_ref, b1_ref, w2_ref, b2_ref, w3_ref, b3_ref, o_ref):
    """Batch-minor 3-layer MLP.

    x_ref : (TB, S) f32  batch-major input tile (as stored in HBM)
    wN_ref: (out_features, in_features) f32  -- native PyTorch layout
    bN_ref: (out_features, 1) f32
    o_ref : (A, TB) f32  batch on the lane axis -> lane-dense store
    """
    x = x_ref[...]                                            # (TB, S)

    # fc_1: (H, S) . (TB, S)^T -> (H, TB). A @ B^T contraction (both operands
    # contract their minor dim) keeps batch on the lane axis with no explicit
    # transpose of x.
    h = lax.dot_general(
        w1_ref[...], x,
        dimension_numbers=(((1,), (1,)), ((), ())),
        preferred_element_type=jnp.float32,
    )
    h = _leaky_relu(h + b1_ref[...])

    # fc_2: (H, H) . (H, TB) -> (H, TB)
    h = jnp.dot(w2_ref[...], h, preferred_element_type=jnp.float32)
    h = _leaky_relu(h + b2_ref[...])

    # fc_3 (no activation): (A, H) . (H, TB) -> (A, TB)
    out = jnp.dot(w3_ref[...], h, preferred_element_type=jnp.float32)
    o_ref[...] = (out + b3_ref[...]).astype(o_ref.dtype)


def _choose_batch_tile(B, batch_tile):
    """Pick the per-grid-step batch tile TB.

    * B <= 256: one tile, rounded up to 8 sublanes (single grid step).
    * B  > 256: a multiple of 128 (lane-dense out block), capped both by
      `batch_tile` and by ~ceil(B/2) so the grid has >= 2 steps and both v7x
      TensorCores get work under dimension_semantics=("parallel",).
    """
    if B <= 256:
        return _round_up(B, 8)
    half = _round_up(pl.cdiv(B, 2), 128)
    return min(_round_up(batch_tile, 128), half)


def qnetwork_forward(x, params, *, batch_tile=8192):
    """QNetwork forward.

    x:      (B, state_dim) float32
    params: w1 (H,S), b1 (H,1), w2 (H,H), b2 (H,1), w3 (A,H), b3 (A,1) float32
            (weights in native PyTorch (out_features, in_features) layout).
    returns (B, action_dim) float32.
    """
    w1, b1 = params["w1"], params["b1"]
    w2, b2 = params["w2"], params["b2"]
    w3, b3 = params["w3"], params["b3"]

    B, S = x.shape
    A = w3.shape[0]

    TB = _choose_batch_tile(B, batch_tile)
    G = pl.cdiv(B, TB)
    if B < TB:
        # Tiny-batch path only (B <= 256): pad the single tile so block dims
        # never exceed array dims. Negligible (< 16 KB); the large-B path is
        # pad-free and relies on Pallas masking the ragged last block.
        x = jnp.pad(x, ((0, TB - B), (0, 0)))

    def resident(arr):
        # Constant index_map -> operand stays resident in VMEM across the grid.
        return pl.BlockSpec(arr.shape, lambda i: (0, 0))

    out_t = pl.pallas_call(
        qnetwork_kernel,
        out_shape=jax.ShapeDtypeStruct((A, G * TB), jnp.float32),
        grid_spec=pl.GridSpec(
            grid=(G,),
            in_specs=[
                pl.BlockSpec((TB, S), lambda i: (i, 0)),   # x streamed over batch
                resident(w1), resident(b1),
                resident(w2), resident(b2),
                resident(w3), resident(b3),
            ],
            # Batch on the lane axis: lane-dense stores (TB is a multiple of
            # 128 whenever G > 1; for G == 1 the block equals the full array).
            out_specs=pl.BlockSpec((A, TB), lambda i: (0, i)),
        ),
        compiler_params=pltpu.CompilerParams(
            dimension_semantics=("parallel",),   # megacore sharding on v7x
            vmem_limit_bytes=32 * 1024 * 1024,   # ~13 MiB used at TB=8192
        ),
    )(x, w1, b1, w2, b2, w3, b3)

    # (A, G*TB) -> (B, A): tiny transpose/slice on the 4-wide output only.
    return out_t[:, :B].T


def init_params(key, state_dim, hidden_dim, action_dim):
    """nn.Linear-style U(-1/sqrt(fan_in), 1/sqrt(fan_in)) init, PyTorch layout."""
    ks = jax.random.split(key, 6)

    def linear(kw, kb, fan_in, fan_out):
        bound = 1.0 / jnp.sqrt(jnp.asarray(fan_in, jnp.float32))
        w = jax.random.uniform(kw, (fan_out, fan_in), jnp.float32, -bound, bound)
        b = jax.random.uniform(kb, (fan_out, 1), jnp.float32, -bound, bound)
        return w, b

    w1, b1 = linear(ks[0], ks[1], state_dim, hidden_dim)
    w2, b2 = linear(ks[2], ks[3], hidden_dim, hidden_dim)
    w3, b3 = linear(ks[4], ks[5], hidden_dim, action_dim)
    return {"w1": w1, "b1": b1, "w2": w2, "b2": b2, "w3": w3, "b3": b3}


def qnetwork_ref(x, p):
    """Pure-JAX f32 reference of the PyTorch forward (for verification)."""
    h1 = _leaky_relu(x @ p["w1"].T + p["b1"].T)
    h2 = _leaky_relu(h1 @ p["w2"].T + p["b2"].T)
    return h2 @ p["w3"].T + p["b3"].T


if __name__ == "__main__":
    state_dim, hidden_dim, action_dim = 16, 32, 4

    key = jax.random.PRNGKey(0)
    k_p, k_x1, k_x2 = jax.random.split(key, 3)
    params = init_params(k_p, state_dim, hidden_dim, action_dim)

    fwd = jax.jit(qnetwork_forward)

    # 1) Tiny batch: single grid step (B=2, TB=8).
    x_small = jax.random.normal(k_x1, (2, state_dim), jnp.float32)
    out_small = jax.block_until_ready(fwd(x_small, params))
    ref_small = qnetwork_ref(x_small, params)
    assert out_small.shape == (2, action_dim), out_small.shape
    # All-f32 path: typically agrees to ~1e-6; bound kept loose as a guard.
    assert jnp.allclose(out_small, ref_small, atol=1e-2, rtol=1e-2), (
        jnp.max(jnp.abs(out_small - ref_small)))

    # 2) Multi-step grid with a ragged last block (B=300 -> TB=256, G=2):
    #    exercises the pipelined path and partial-block masking.
    x_big = jax.random.normal(k_x2, (300, state_dim), jnp.float32)
    out_big = jax.block_until_ready(fwd(x_big, params))
    ref_big = qnetwork_ref(x_big, params)
    assert out_big.shape == (300, action_dim), out_big.shape
    assert jnp.allclose(out_big, ref_big, atol=1e-2, rtol=1e-2), (
        jnp.max(jnp.abs(out_big - ref_big)))

    print("KERNEL_OK")
</pallas_src>

<mosaic_0001>
module attributes {stable_mosaic.version = 11 : i64} {
  func.func @qnetwork_kernel(%arg0: i32, %arg1: memref<8x16xf32, #tpu.memory_space<vmem>>, %arg2: memref<32x16xf32, #tpu.memory_space<vmem>>, %arg3: memref<32x1xf32, #tpu.memory_space<vmem>>, %arg4: memref<32x32xf32, #tpu.memory_space<vmem>>, %arg5: memref<32x1xf32, #tpu.memory_space<vmem>>, %arg6: memref<4x32xf32, #tpu.memory_space<vmem>>, %arg7: memref<4x1xf32, #tpu.memory_space<vmem>>, %arg8: memref<4x8xf32, #tpu.memory_space<vmem>>) attributes {dimension_semantics = [#tpu.dimension_semantics<parallel>], iteration_bounds = array<i64: 1>, scalar_prefetch = 0 : i64, scratch_operands = 0 : i64, tpu.core_type = #tpu.core_type<tc>, window_params = [{transform_indices = @transform_0, window_bounds = array<i64: 8, 16>}, {pipeline_mode = #tpu.pipeline_mode<synchronous>, transform_indices = @transform_1, window_bounds = array<i64: 32, 16>}, {pipeline_mode = #tpu.pipeline_mode<synchronous>, transform_indices = @transform_2, window_bounds = array<i64: 32, 1>}, {pipeline_mode = #tpu.pipeline_mode<synchronous>, transform_indices = @transform_3, window_bounds = array<i64: 32, 32>}, {pipeline_mode = #tpu.pipeline_mode<synchronous>, transform_indices = @transform_4, window_bounds = array<i64: 32, 1>}, {pipeline_mode = #tpu.pipeline_mode<synchronous>, transform_indices = @transform_5, window_bounds = array<i64: 4, 32>}, {pipeline_mode = #tpu.pipeline_mode<synchronous>, transform_indices = @transform_6, window_bounds = array<i64: 4, 1>}, {transform_indices = @transform_7, window_bounds = array<i64: 4, 8>}]} {
    %c0 = arith.constant 0 : index
    %c0_0 = arith.constant 0 : index
    %0 = vector.load %arg1[%c0, %c0_0] : memref<8x16xf32, #tpu.memory_space<vmem>>, vector<8x16xf32>
    %c0_1 = arith.constant 0 : index
    %c0_2 = arith.constant 0 : index
    %1 = vector.load %arg2[%c0_1, %c0_2] : memref<32x16xf32, #tpu.memory_space<vmem>>, vector<32x16xf32>
    %cst = arith.constant dense<0.000000e+00> : vector<32x8xf32>
    %2 = tpu.matmul %1, %0, %cst {dimension_numbers = #tpu.dot_dimension_numbers<[1], [1], [0], [0], [0, 0, 1, 0], [], []>} : vector<32x16xf32>, vector<8x16xf32>, vector<32x8xf32> -> vector<32x8xf32>
    %c0_3 = arith.constant 0 : index
    %c0_4 = arith.constant 0 : index
    %3 = vector.load %arg3[%c0_3, %c0_4] : memref<32x1xf32, #tpu.memory_space<vmem>>, vector<32x1xf32>
    %4 = vector.broadcast %3 : vector<32x1xf32> to vector<32x8xf32>
    %5 = arith.addf %2, %4 : vector<32x8xf32>
    %cst_5 = arith.constant 0.00999999977 : f32
    %6 = vector.broadcast %cst_5 : f32 to vector<32x8xf32>
    %7 = arith.mulf %6, %5 : vector<32x8xf32>
    %8 = arith.maximumf %5, %7 : vector<32x8xf32>
    %c0_6 = arith.constant 0 : index
    %c0_7 = arith.constant 0 : index
    %9 = vector.load %arg4[%c0_6, %c0_7] : memref<32x32xf32, #tpu.memory_space<vmem>>, vector<32x32xf32>
    %cst_8 = arith.constant dense<0.000000e+00> : vector<32x8xf32>
    %10 = tpu.matmul %9, %8, %cst_8 {dimension_numbers = #tpu.dot_dimension_numbers<[1], [0], [0], [1], [0, 0, 1, 1], [], []>} : vector<32x32xf32>, vector<32x8xf32>, vector<32x8xf32> -> vector<32x8xf32>
    %c0_9 = arith.constant 0 : index
    %c0_10 = arith.constant 0 : index
    %11 = vector.load %arg5[%c0_9, %c0_10] : memref<32x1xf32, #tpu.memory_space<vmem>>, vector<32x1xf32>
    %12 = vector.broadcast %11 : vector<32x1xf32> to vector<32x8xf32>
    %13 = arith.addf %10, %12 : vector<32x8xf32>
    %cst_11 = arith.constant 0.00999999977 : f32
    %14 = vector.broadcast %cst_11 : f32 to vector<32x8xf32>
    %15 = arith.mulf %14, %13 : vector<32x8xf32>
    %16 = arith.maximumf %13, %15 : vector<32x8xf32>
    %c0_12 = arith.constant 0 : index
    %c0_13 = arith.constant 0 : index
    %17 = vector.load %arg6[%c0_12, %c0_13] : memref<4x32xf32, #tpu.memory_space<vmem>>, vector<4x32xf32>
    %cst_14 = arith.constant dense<0.000000e+00> : vector<4x8xf32>
    %18 = tpu.matmul %17, %16, %cst_14 {dimension_numbers = #tpu.dot_dimension_numbers<[1], [0], [0], [1], [0, 0, 1, 1], [], []>} : vector<4x32xf32>, vector<32x8xf32>, vector<4x8xf32> -> vector<4x8xf32>
    %c0_15 = arith.constant 0 : index
    %c0_16 = arith.constant 0 : index
    %19 = vector.load %arg7[%c0_15, %c0_16] : memref<4x1xf32, #tpu.memory_space<vmem>>, vector<4x1xf32>
    %20 = vector.broadcast %19 : vector<4x1xf32> to vector<4x8xf32>
    %21 = arith.addf %18, %20 : vector<4x8xf32>
    %c0_17 = arith.constant 0 : index
    %c0_18 = arith.constant 0 : index
    %22 = vector.load %arg8[%c0_17, %c0_18] : memref<4x8xf32, #tpu.memory_space<vmem>>, vector<4x8xf32>
    tpu.vector_store %arg8[%c0_17, %c0_18], %21 {strides = array<i32>} : memref<4x8xf32, #tpu.memory_space<vmem>>, vector<4x8xf32>,
    return
  }
  func.func @transform_0(%arg0: i32) -> (i32, i32) {
    %c0_i32 = arith.constant 0 : i32
    %c0_i32_0 = arith.constant 0 : i32
    return %arg0, %c0_i32 : i32, i32
  }
  func.func @transform_1(%arg0: i32) -> (i32, i32) {
    %c0_i32 = arith.constant 0 : i32
    %c0_i32_0 = arith.constant 0 : i32
    %c0_i32_1 = arith.constant 0 : i32
    return %c0_i32, %c0_i32_0 : i32, i32
  }
  func.func @transform_2(%arg0: i32) -> (i32, i32) {
    %c0_i32 = arith.constant 0 : i32
    %c0_i32_0 = arith.constant 0 : i32
    %c0_i32_1 = arith.constant 0 : i32
    return %c0_i32, %c0_i32_0 : i32, i32
  }
  func.func @transform_3(%arg0: i32) -> (i32, i32) {
    %c0_i32 = arith.constant 0 : i32
    %c0_i32_0 = arith.constant 0 : i32
    %c0_i32_1 = arith.constant 0 : i32
    return %c0_i32, %c0_i32_0 : i32, i32
  }
  func.func @transform_4(%arg0: i32) -> (i32, i32) {
    %c0_i32 = arith.constant 0 : i32
    %c0_i32_0 = arith.constant 0 : i32
    %c0_i32_1 = arith.constant 0 : i32
    return %c0_i32, %c0_i32_0 : i32, i32
  }
  func.func @transform_5(%arg0: i32) -> (i32, i32) {
    %c0_i32 = arith.constant 0 : i32
    %c0_i32_0 = arith.constant 0 : i32
    %c0_i32_1 = arith.constant 0 : i32
    return %c0_i32, %c0_i32_0 : i32, i32
  }
  func.func @transform_6(%arg0: i32) -> (i32, i32) {
    %c0_i32 = arith.constant 0 : i32
    %c0_i32_0 = arith.constant 0 : i32
    %c0_i32_1 = arith.constant 0 : i32
    return %c0_i32, %c0_i32_0 : i32, i32
  }
  func.func @transform_7(%arg0: i32) -> (i32, i32) {
    %c0_i32 = arith.constant 0 : i32
    %c0_i32_0 = arith.constant 0 : i32
    return %c0_i32, %arg0 : i32, i32
  }
}

</mosaic_0001>

<llo_original>
// kernel: qnetwork_forward.1
$region0: #{qnetwork_forward.1}
  #allocation0 [shape = 'u32[]', space=smem, size = 0x4, offset = 0x4, fixed_abs, tag = 'smem constant byte address 0x4 - core index']
  #allocation1 [shape = 'u32[144,128]{1,0:T(1,128)}', space=vmem, size = 0x12000, scoped, tag = 'internal scratch']
  %s0 = inlined_call_operand.vmem [shape: f32[8,16], index: 0, kind: input, shape index: {}]
  %s1 = inlined_call_operand.vmem [shape: f32[32,16], index: 1, kind: input, shape index: {}]
  %s2 = inlined_call_operand.vmem [shape: f32[32,1], index: 2, kind: input, shape index: {}]
  %s3 = inlined_call_operand.vmem [shape: f32[32,32], index: 3, kind: input, shape index: {}]
  %s4 = inlined_call_operand.vmem [shape: f32[32,1], index: 4, kind: input, shape index: {}]
  %s5 = inlined_call_operand.vmem [shape: f32[4,32], index: 5, kind: input, shape index: {}]
  %s6 = inlined_call_operand.vmem [shape: f32[4,1], index: 6, kind: input, shape index: {}]
  %s7 = inlined_call_operand.vmem [shape: f32[4,8], index: 7, kind: output, shape index: {}]
  %s8 = sld [smem:[#allocation0]]
  $region38: #{qnetwork_forward.1} parent=0
    _
  %s10 = ssub.s32 1, %s8
  %s11 = scalar_select 0, %s10, %s8
  // Predicated region
  $region2: #{qnetwork_forward.1} parent=0 // pred_check
    _
  $region3: #{qnetwork_forward.1} parent=0 // pred_check_branch
    %13 = sbr.rel (0) target = $region5
  $region4: #{qnetwork_forward.1} parent=0 // pred_region
    _
  $region5: #{qnetwork_forward.1} parent=0 // pred_fallthru
    _
  // Predicated region
  $region6: #{qnetwork_forward.1} parent=0 // pred_check
    _
  $region7: #{qnetwork_forward.1} parent=0 // pred_check_branch
    %15 = sbr.rel (0) target = $region9
  $region8: #{qnetwork_forward.1} parent=0 // pred_region
    _
  $region9: #{qnetwork_forward.1} parent=0 // pred_fallthru
    _
  // Predicated region
  $region10: #{qnetwork_forward.1} parent=0 // pred_check
    _
  $region11: #{qnetwork_forward.1} parent=0 // pred_check_branch
    %17 = sbr.rel (0) target = $region13
  $region12: #{qnetwork_forward.1} parent=0 // pred_region
    _
  $region13: #{qnetwork_forward.1} parent=0 // pred_fallthru
    _
  // Predicated region
  $region14: #{qnetwork_forward.1} parent=0 // pred_check
    _
  $region15: #{qnetwork_forward.1} parent=0 // pred_check_branch
    %19 = sbr.rel (0) target = $region17
  $region16: #{qnetwork_forward.1} parent=0 // pred_region
    _
  $region17: #{qnetwork_forward.1} parent=0 // pred_fallthru
    _
  // Predicated region
  $region18: #{qnetwork_forward.1} parent=0 // pred_check
    _
  $region19: #{qnetwork_forward.1} parent=0 // pred_check_branch
    %21 = sbr.rel (0) target = $region21
  $region20: #{qnetwork_forward.1} parent=0 // pred_region
    _
  $region21: #{qnetwork_forward.1} parent=0 // pred_fallthru
    _
  // Predicated region
  $region22: #{qnetwork_forward.1} parent=0 // pred_check
    _
  $region23: #{qnetwork_forward.1} parent=0 // pred_check_branch
    %23 = sbr.rel (0) target = $region25
  $region24: #{qnetwork_forward.1} parent=0 // pred_region
    _
  $region25: #{qnetwork_forward.1} parent=0 // pred_fallthru
    _
  // Predicated region
  $region26: #{qnetwork_forward.1} parent=0 // pred_check
    _
  $region27: #{qnetwork_forward.1} parent=0 // pred_check_branch
    %25 = sbr.rel (0) target = $region29
  $region28: #{qnetwork_forward.1} parent=0 // pred_region
    _
  $region29: #{qnetwork_forward.1} parent=0 // pred_fallthru
    _
  %v26 = vld [vmem:[%s0] sm:$0xff]
  %v27 = vld [vmem:[%s1] sm:$0xff]
  %v28 = vld [vmem:[%s1 + $0x8] sm:$0xff]
  %v29 = vld [vmem:[%s1 + $0x10] sm:$0xff]
  %v30 = vld [vmem:[%s1 + $0x18] sm:$0xff]
  %v31 = vld [vmem:[%s2] sm:$0xff]
  %v32 = vld [vmem:[%s2 + $0x8] sm:$0xff]
  %v33 = vld [vmem:[%s2 + $0x10] sm:$0xff]
  %v34 = vld [vmem:[%s2 + $0x18] sm:$0xff]
  %36 = vset.pattern.permute.xlu0 0
  %37 = vperm.xlu0 %36, %v31
  %v38 = vpop.permute.xlu0 %37
  %41 = vset.pattern.permute.xlu0 0
  %42 = vperm.xlu0 %41, %v32
  %v43 = vpop.permute.xlu0 %42
  %46 = vset.pattern.permute.xlu0 0
  %47 = vperm.xlu0 %46, %v33
  %v48 = vpop.permute.xlu0 %47
  %51 = vset.pattern.permute.xlu0 0
  %52 = vperm.xlu0 %51, %v34
  %v53 = vpop.permute.xlu0 %52
  %vm55 = vcmask 130048
  %v57 = vsel %vm55, %v27, 0
  %v60 = vsel %vm55, %v28, 0
  %v63 = vsel %vm55, %v29, 0
  %v66 = vsel %vm55, %v30, 0
  %v69 = vsel %vm55, %v26, 0
  %71 = vmatprep.subr.mxu0 0.0
  %72 = vmatpush1.xpose.msra.mxu0 %v69
  %73 = vmatprep.subr.mxu0 0.0
  %74 = vmatpush1.xpose.msra.mxu0 0.0
  %75 = vmatprep.subr.mxu0 0.0
  %76 = vmatpush1.xpose.msra.mxu0 0.0
  %77 = vmatprep.subr.mxu0 0.0
  %78 = vmatpush1.xpose.msra.mxu0 0.0
  %79 = vmatprep.subr.mxu0 0.0
  %80 = vmatpush1.xpose.msra.mxu0 0.0
  %81 = vmatprep.subr.mxu0 0.0
  %82 = vmatpush1.xpose.msra.mxu0 0.0
  %83 = vmatprep.subr.mxu0 0.0
  %84 = vmatpush1.xpose.msra.mxu0 0.0
  %85 = vmatprep.subr.mxu0 0.0
  %86 = vmatpush1.xpose.msra.mxu0 0.0
  %87 = vmatprep.subr.mxu0 0.0
  %88 = vmatpush1.xpose.msra.mxu0 0.0
  %89 = vmatprep.subr.mxu0 0.0
  %90 = vmatpush1.xpose.msra.mxu0 0.0
  %91 = vmatprep.subr.mxu0 0.0
  %92 = vmatpush1.xpose.msra.mxu0 0.0
  %93 = vmatprep.subr.mxu0 0.0
  %94 = vmatpush1.xpose.msra.mxu0 0.0
  %95 = vmatprep.subr.mxu0 0.0
  %96 = vmatpush1.xpose.msra.mxu0 0.0
  %97 = vmatprep.subr.mxu0 0.0
  %98 = vmatpush1.xpose.msra.mxu0 0.0
  %99 = vmatprep.subr.mxu0 0.0
  %100 = vmatpush1.xpose.msra.mxu0 0.0
  %101 = vmatprep.subr.mxu0 0.0
  %102 = vmatpush1.xpose.msra.mxu0 0.0
  %103 = vmatprep.subr.mxu0 0.0
  %104 = vmatpush1.xpose.msra.mxu0 0.0
  %105 = vmatprep.subr.mxu0 0.0
  %106 = vmatpush1.xpose.msra.mxu0 0.0
  %107 = vmatprep.subr.mxu0 0.0
  %108 = vmatpush1.xpose.msra.mxu0 0.0
  %109 = vmatprep.subr.mxu0 0.0
  %110 = vmatpush1.xpose.msra.mxu0 0.0
  %111 = vmatprep.subr.mxu0 0.0
  %112 = vmatpush1.xpose.msra.mxu0 0.0
  %113 = vmatprep.subr.mxu0 0.0
  %114 = vmatpush1.xpose.msra.mxu0 0.0
  %115 = vmatprep.subr.mxu0 0.0
  %116 = vmatpush1.xpose.msra.mxu0 0.0
  %117 = vmatprep.subr.mxu0 0.0
  %118 = vmatpush1.xpose.msra.mxu0 0.0
  %119 = vmatprep.subr.mxu0 0.0
  %120 = vmatpush1.xpose.msra.mxu0 0.0
  %121 = vmatprep.subr.mxu0 0.0
  %122 = vmatpush1.xpose.msra.mxu0 0.0
  %123 = vmatprep.subr.mxu0 0.0
  %124 = vmatpush1.xpose.msra.mxu0 0.0
  %125 = vmatprep.subr.mxu0 0.0
  %126 = vmatpush1.xpose.msra.mxu0 0.0
  %127 = vmatprep.subr.mxu0 0.0
  %128 = vmatpush1.xpose.msra.mxu0 0.0
  %129 = vmatprep.subr.mxu0 0.0
  %130 = vmatpush1.xpose.msra.mxu0 0.0
  %131 = vmatprep.subr.mxu0 0.0
  %132 = vmatpush1.xpose.msra.mxu0 0.0
  %133 = vmatprep.subr.mxu0 0.0
  %134 = vmatpush1.xpose.msra.mxu0 0.0
  %135 = vmatprep.mubr.f32.mxu0 0.0
  %136 = vmatmul.mubr.f32.gmra.mrb[0].mxu0 %v57
  %v137 = vpop.f32.mrb[0].mxu0
  %v138 = vadd.f32 %v38, %v137
  %v139 = vpop.f32.mrb[0].mxu0
  %140 = vmatprep.mubr.f32.mxu0 0.0
  %141 = vmatmul.mubr.f32.gmra.mrb[0].mxu0 %v60
  %v142 = vpop.f32.mrb[0].mxu0
  %v143 = vadd.f32 %v43, %v142
  %v144 = vpop.f32.mrb[0].mxu0
  %145 = vmatprep.mubr.f32.mxu0 0.0
  %146 = vmatmul.mubr.f32.gmra.mrb[0].mxu0 %v63
  %v147 = vpop.f32.mrb[0].mxu0
  %v148 = vadd.f32 %v48, %v147
  %v149 = vpop.f32.mrb[0].mxu0
  %150 = vmatprep.mubr.f32.mxu0 0.0
  %151 = vmatmul.mubr.f32.gmra.mrb[0].mxu0 %v66
  %v152 = vpop.f32.mrb[0].mxu0
  %v153 = vadd.f32 %v53, %v152
  %v154 = vpop.f32.mrb[0].mxu0
  %155 = vdwg.mxu0
  %v156 = vmul.f32 %v138, 0.01
  %v157 = vmul.f32 %v143, 0.01
  %v158 = vmul.f32 %v148, 0.01
  %v159 = vmul.f32 %v153, 0.01
  %v160 = vmax.f32 %v138, %v156
  %v161 = vmax.f32 %v143, %v157
  %v162 = vmax.f32 %v148, %v158
  %v163 = vmax.f32 %v153, %v159
  %v164 = vld [vmem:[%s3] sm:$0xff]
  %v165 = vld [vmem:[%s3 + $0x8] sm:$0xff]
  %v166 = vld [vmem:[%s3 + $0x10] sm:$0xff]
  %v167 = vld [vmem:[%s3 + $0x18] sm:$0xff]
  %v168 = vld [vmem:[%s4] sm:$0xff]
  %v169 = vld [vmem:[%s4 + $0x8] sm:$0xff]
  %v170 = vld [vmem:[%s4 + $0x10] sm:$0xff]
  %v171 = vld [vmem:[%s4 + $0x18] sm:$0xff]
  %173 = vset.pattern.permute.xlu0 0
  %174 = vperm.xlu0 %173, %v168
  %v175 = vpop.permute.xlu0 %174
  %178 = vset.pattern.permute.xlu0 0
  %179 = vperm.xlu0 %178, %v169
  %v180 = vpop.permute.xlu0 %179
  %183 = vset.pattern.permute.xlu0 0
  %184 = vperm.xlu0 %183, %v170
  %v185 = vpop.permute.xlu0 %184
  %188 = vset.pattern.permute.xlu0 0
  %189 = vperm.xlu0 %188, %v171
  %v190 = vpop.permute.xlu0 %189
  %vm192 = vcmask 261120
  %v194 = vsel %vm192, %v164, 0
  %v197 = vsel %vm192, %v165, 0
  %v200 = vsel %vm192, %v166, 0
  %v203 = vsel %vm192, %v167, 0
  %205 = vmatprep.subr.mxu0 0.0
  %206 = vmatpush1.msra.mxu0 %v160
  %207 = vmatprep.subr.mxu0 0.0
  %208 = vmatpush1.msra.mxu0 %v161
  %209 = vmatprep.subr.mxu0 0.0
  %210 = vmatpush1.msra.mxu0 %v162
  %211 = vmatprep.subr.mxu0 0.0
  %212 = vmatpush1.msra.mxu0 %v163
  %213 = vmatprep.subr.mxu0 0.0
  %214 = vmatpush1.msra.mxu0 0.0
  %215 = vmatprep.subr.mxu0 0.0
  %216 = vmatpush1.msra.mxu0 0.0
  %217 = vmatprep.subr.mxu0 0.0
  %218 = vmatpush1.msra.mxu0 0.0
  %219 = vmatprep.subr.mxu0 0.0
  %220 = vmatpush1.msra.mxu0 0.0
  %221 = vmatprep.subr.mxu0 0.0
  %222 = vmatpush1.msra.mxu0 0.0
  %223 = vmatprep.subr.mxu0 0.0
  %224 = vmatpush1.msra.mxu0 0.0
  %225 = vmatprep.subr.mxu0 0.0
  %226 = vmatpush1.msra.mxu0 0.0
  %227 = vmatprep.subr.mxu0 0.0
  %228 = vmatpush1.msra.mxu0 0.0
  %229 = vmatprep.subr.mxu0 0.0
  %230 = vmatpush1.msra.mxu0 0.0
  %231 = vmatprep.subr.mxu0 0.0
  %232 = vmatpush1.msra.mxu0 0.0
  %233 = vmatprep.subr.mxu0 0.0
  %234 = vmatpush1.msra.mxu0 0.0
  %235 = vmatprep.subr.mxu0 0.0
  %236 = vmatpush1.msra.mxu0 0.0
  %237 = vmatprep.subr.mxu0 0.0
  %238 = vmatpush1.msra.mxu0 0.0
  %239 = vmatprep.subr.mxu0 0.0
  %240 = vmatpush1.msra.mxu0 0.0
  %241 = vmatprep.subr.mxu0 0.0
  %242 = vmatpush1.msra.mxu0 0.0
  %243 = vmatprep.subr.mxu0 0.0
  %244 = vmatpush1.msra.mxu0 0.0
  %245 = vmatprep.subr.mxu0 0.0
  %246 = vmatpush1.msra.mxu0 0.0
  %247 = vmatprep.subr.mxu0 0.0
  %248 = vmatpush1.msra.mxu0 0.0
  %249 = vmatprep.subr.mxu0 0.0
  %250 = vmatpush1.msra.mxu0 0.0
  %251 = vmatprep.subr.mxu0 0.0
  %252 = vmatpush1.msra.mxu0 0.0
  %253 = vmatprep.subr.mxu0 0.0
  %254 = vmatpush1.msra.mxu0 0.0
  %255 = vmatprep.subr.mxu0 0.0
  %256 = vmatpush1.msra.mxu0 0.0
  %257 = vmatprep.subr.mxu0 0.0
  %258 = vmatpush1.msra.mxu0 0.0
  %259 = vmatprep.subr.mxu0 0.0
  %260 = vmatpush1.msra.mxu0 0.0
  %261 = vmatprep.subr.mxu0 0.0
  %262 = vmatpush1.msra.mxu0 0.0
  %263 = vmatprep.subr.mxu0 0.0
  %264 = vmatpush1.msra.mxu0 0.0
  %265 = vmatprep.subr.mxu0 0.0
  %266 = vmatpush1.msra.mxu0 0.0
  %267 = vmatprep.subr.mxu0 0.0
  %268 = vmatpush1.msra.mxu0 0.0
  %269 = vmatprep.mubr.f32.mxu0 0.0
  %270 = vmatmul.mubr.f32.gmra.mrb[0].mxu0 %v194
  %v271 = vpop.f32.mrb[0].mxu0
  %v272 = vadd.f32 %v175, %v271
  %v273 = vpop.f32.mrb[0].mxu0
  %274 = vmatprep.mubr.f32.mxu0 0.0
  %275 = vmatmul.mubr.f32.gmra.mrb[0].mxu0 %v197
  %v276 = vpop.f32.mrb[0].mxu0
  %v277 = vadd.f32 %v180, %v276
  %v278 = vpop.f32.mrb[0].mxu0
  %279 = vmatprep.mubr.f32.mxu0 0.0
  %280 = vmatmul.mubr.f32.gmra.mrb[0].mxu0 %v200
  %v281 = vpop.f32.mrb[0].mxu0
  %v282 = vadd.f32 %v185, %v281
  %v283 = vpop.f32.mrb[0].mxu0
  %284 = vmatprep.mubr.f32.mxu0 0.0
  %285 = vmatmul.mubr.f32.gmra.mrb[0].mxu0 %v203
  %v286 = vpop.f32.mrb[0].mxu0
  %v287 = vadd.f32 %v190, %v286
  %v288 = vpop.f32.mrb[0].mxu0
  %289 = vdwg.mxu0
  %v290 = vmul.f32 %v272, 0.01
  %v291 = vmul.f32 %v277, 0.01
  %v292 = vmul.f32 %v282, 0.01
  %v293 = vmul.f32 %v287, 0.01
  %v294 = vmax.f32 %v272, %v290
  %v295 = vmax.f32 %v277, %v291
  %v296 = vmax.f32 %v282, %v292
  %v297 = vmax.f32 %v287, %v293
  %v298 = vld [vmem:[%s5] sm:$0xf]
  %v299 = vld [vmem:[%s6] sm:$0xf]
  %301 = vset.pattern.permute.xlu0 0
  %302 = vperm.xlu0 %301, %v299
  %v303 = vpop.permute.xlu0 %302
  %v306 = vsel %vm192, %v298, 0
  %308 = vmatprep.subr.mxu0 0.0
  %309 = vmatpush1.msra.mxu0 %v294
  %310 = vmatprep.subr.mxu0 0.0
  %311 = vmatpush1.msra.mxu0 %v295
  %312 = vmatprep.subr.mxu0 0.0
  %313 = vmatpush1.msra.mxu0 %v296
  %314 = vmatprep.subr.mxu0 0.0
  %315 = vmatpush1.msra.mxu0 %v297
  %316 = vmatprep.subr.mxu0 0.0
  %317 = vmatpush1.msra.mxu0 0.0
  %318 = vmatprep.subr.mxu0 0.0
  %319 = vmatpush1.msra.mxu0 0.0
  %320 = vmatprep.subr.mxu0 0.0
  %321 = vmatpush1.msra.mxu0 0.0
  %322 = vmatprep.subr.mxu0 0.0
  %323 = vmatpush1.msra.mxu0 0.0
  %324 = vmatprep.subr.mxu0 0.0
  %325 = vmatpush1.msra.mxu0 0.0
  %326 = vmatprep.subr.mxu0 0.0
  %327 = vmatpush1.msra.mxu0 0.0
  %328 = vmatprep.subr.mxu0 0.0
  %329 = vmatpush1.msra.mxu0 0.0
  %330 = vmatprep.subr.mxu0 0.0
  %331 = vmatpush1.msra.mxu0 0.0
  %332 = vmatprep.subr.mxu0 0.0
  %333 = vmatpush1.msra.mxu0 0.0
  %334 = vmatprep.subr.mxu0 0.0
  %335 = vmatpush1.msra.mxu0 0.0
  %336 = vmatprep.subr.mxu0 0.0
  %337 = vmatpush1.msra.mxu0 0.0
  %338 = vmatprep.subr.mxu0 0.0
  %339 = vmatpush1.msra.mxu0 0.0
  %340 = vmatprep.subr.mxu0 0.0
  %341 = vmatpush1.msra.mxu0 0.0
  %342 = vmatprep.subr.mxu0 0.0
  %343 = vmatpush1.msra.mxu0 0.0
  %344 = vmatprep.subr.mxu0 0.0
  %345 = vmatpush1.msra.mxu0 0.0
  %346 = vmatprep.subr.mxu0 0.0
  %347 = vmatpush1.msra.mxu0 0.0
  %348 = vmatprep.subr.mxu0 0.0
  %349 = vmatpush1.msra.mxu0 0.0
  %350 = vmatprep.subr.mxu0 0.0
  %351 = vmatpush1.msra.mxu0 0.0
  %352 = vmatprep.subr.mxu0 0.0
  %353 = vmatpush1.msra.mxu0 0.0
  %354 = vmatprep.subr.mxu0 0.0
  %355 = vmatpush1.msra.mxu0 0.0
  %356 = vmatprep.subr.mxu0 0.0
  %357 = vmatpush1.msra.mxu0 0.0
  %358 = vmatprep.subr.mxu0 0.0
  %359 = vmatpush1.msra.mxu0 0.0
  %360 = vmatprep.subr.mxu0 0.0
  %361 = vmatpush1.msra.mxu0 0.0
  %362 = vmatprep.subr.mxu0 0.0
  %363 = vmatpush1.msra.mxu0 0.0
  %364 = vmatprep.subr.mxu0 0.0
  %365 = vmatpush1.msra.mxu0 0.0
  %366 = vmatprep.subr.mxu0 0.0
  %367 = vmatpush1.msra.mxu0 0.0
  %368 = vmatprep.subr.mxu0 0.0
  %369 = vmatpush1.msra.mxu0 0.0
  %370 = vmatprep.subr.mxu0 0.0
  %371 = vmatpush1.msra.mxu0 0.0
  %372 = vmatprep.mubr.f32.mxu0 0.0
  %373 = vmatmul.mubr.f32.gmra.mrb[0].mxu0 %v306
  %v374 = vpop.f32.mrb[0].mxu0
  %v375 = vadd.f32 %v303, %v374
  %v376 = vpop.f32.mrb[0].mxu0
  %377 = vdwg.mxu0
  %vm378 = vcmask 60416
  %379 = vst.msk [vmem:[%s7] sm:$0xf] %vm378, %v375
  // Predicated region
  $region30: #{qnetwork_forward.1} parent=0 // pred_check
    _
  $region31: #{qnetwork_forward.1} parent=0 // pred_check_branch
    %381 = sbr.rel (0) target = $region33
  $region32: #{qnetwork_forward.1} parent=0 // pred_region
    _
  $region33: #{qnetwork_forward.1} parent=0 // pred_fallthru
    _
  // Predicated region
  $region34: #{qnetwork_forward.1} parent=0 // pred_check
    _
  $region35: #{qnetwork_forward.1} parent=0 // pred_check_branch
    %383 = sbr.rel (0) target = $region37
  $region36: #{qnetwork_forward.1} parent=0 // pred_region
    _
  $region37: #{qnetwork_forward.1} parent=0 // pred_fallthru
    _

</llo_original>
